<compile_context>
chip_gen: v7x
topology: tpu7x:2x2x1
jax: 0.10.0
libtpu: 0.0.40
codegen_flags: <defaults>
</compile_context>

<pallas_src>
import functools

import jax
import jax.numpy as jnp
from jax import lax
from jax.experimental import pallas as pl
from jax.experimental.pallas import tpu as pltpu

N_EMBD = 128                      # fixed by the module (n_embd = 128)
NUM_HEADS = 4
HEAD_SIZE = N_EMBD // NUM_HEADS   # 32


# ---------------------------------------------------------------------------
# Fused QKV projection + multi-head causal attention + output projection.
# grid = (B // bt,), one batch tile of `bt` elements per step.
# ---------------------------------------------------------------------------
def _mha_fused_kernel(x_ref, wqkv_ref, wproj_ref, bproj_ref, o_ref,
                      *, num_heads, approx_recip):
    # x_ref:     (bt, T, C)  -- current batch tile (compute dtype)
    # wqkv_ref:  (C, 3C)     -- [Wq*scale | Wk | Wv], head h in cols [h*hs:(h+1)*hs]
    # wproj_ref: (C, C)
    # bproj_ref: (1, C)      -- f32
    # o_ref:     (bt, T, C)  -- final output (lane-dense)
    bt, T, C = x_ref.shape
    H = num_heads
    hs = C // H
    cd = wqkv_ref.dtype                                   # MXU compute dtype

    # ---- fused QKV projection: one (bt*T, C) @ (C, 3C) full-width MXU matmul ----
    x2 = x_ref[...].reshape(bt * T, C).astype(cd)
    qkv = jnp.dot(x2, wqkv_ref[...],
                  preferred_element_type=jnp.float32)     # (bt*T, 3C) f32
    qkv = qkv.reshape(bt, T, 3 * C).astype(cd)            # one full-width cast

    q = qkv[:, :, 0 * C:1 * C]      # scale already folded into Q weight columns
    k = qkv[:, :, 1 * C:2 * C]
    v = qkv[:, :, 2 * C:3 * C]

    # Additive causal mask (0 / -inf), built once and shared by all heads.
    row = lax.broadcasted_iota(jnp.int32, (T, T), 0)
    col = lax.broadcasted_iota(jnp.int32, (T, T), 1)
    mask_add = jnp.where(col <= row, jnp.float32(0.0), jnp.float32(-jnp.inf))
    mask_b = mask_add[None, :, :]                          # (1, T, T)

    # ---- per-head attention (H small & static -> unrolled; batched over bt) ----
    head_outs = []
    for h in range(H):
        qh = q[:, :, h * hs:(h + 1) * hs]                  # (bt, T, hs)
        kh = k[:, :, h * hs:(h + 1) * hs]
        vh = v[:, :, h * hs:(h + 1) * hs]

        wei = jnp.einsum('bqd,bkd->bqk', qh, kh,
                         preferred_element_type=jnp.float32)  # (bt, T, T) f32
        wei = wei + mask_b

        # numerically-stable softmax, kept in f32 (v5e has no bf16 VPU/EUP)
        m = jnp.max(wei, axis=-1, keepdims=True)
        e = jnp.exp(wei - m)
        s = jnp.sum(e, axis=-1, keepdims=True)
        if approx_recip:
            p = e * pl.reciprocal(s, approx=True)          # EUP slot (bf16 path)
        else:
            p = e / s                                      # exact-parity f32 path
        # attention dropout: eval mode -> identity

        oh = jnp.einsum('bqk,bkd->bqd', p.astype(cd), vh,
                        preferred_element_type=jnp.float32)   # (bt, T, hs) f32
        head_outs.append(oh)

    # One lane-dense concat (f32) instead of 32-wide masked scratch stores.
    heads = jnp.concatenate(head_outs, axis=-1).reshape(bt * T, C)

    # ---- fused output projection: (bt*T, C) @ (C, C) + bias ----
    y = jnp.dot(heads.astype(cd), wproj_ref[...],
                preferred_element_type=jnp.float32)        # (bt*T, C) f32
    y = y + bproj_ref[...]                                 # (1, C) broadcast
    # output dropout: eval mode -> identity
    o_ref[...] = y.reshape(bt, T, C).astype(o_ref.dtype)


# ---------------------------------------------------------------------------
# One-time weight packing (hoist out of the per-call forward).
# ---------------------------------------------------------------------------
def pack_mha_params(wq, wk, wv, w_proj, b_proj, compute_dtype=jnp.bfloat16):
    """wq/wk/wv: (H, C, hs) per-head projection weights (x @ w convention)."""
    H, C, hs = wq.shape

    def _pack(w):                                  # (H, C, hs) -> (C, C)
        return jnp.transpose(w, (1, 0, 2)).reshape(C, C)

    scale = jnp.float32(C) ** -0.5                 # module scales by n_embd**-0.5
    w_qkv = jnp.concatenate(
        [_pack(wq) * scale, _pack(wk), _pack(wv)], axis=1)          # (C, 3C)
    return (w_qkv.astype(compute_dtype),
            w_proj.astype(compute_dtype),
            b_proj.reshape(1, C).astype(jnp.float32))


def _pick_block_batch(B, max_bt=8):
    # Largest batch tile (<= max_bt) dividing B that still leaves >= 2 grid
    # steps, so both v7x TensorCores get work when B >= 2.
    for bt in (8, 4, 2):
        if bt <= max_bt and B % bt == 0 and B // bt >= 2:
            return bt
    return 1


# ---------------------------------------------------------------------------
# Forward pass (expects pre-packed weights).
# ---------------------------------------------------------------------------
@functools.partial(jax.jit, static_argnames=("num_heads",))
def mha_forward(x, w_qkv, w_proj, b_proj, num_heads=NUM_HEADS):
    B, T, C = x.shape
    out_dtype = x.dtype
    cd = w_qkv.dtype
    bt = _pick_block_batch(B)

    x_c = x.astype(cd)                             # halves activation DMA for bf16
    kernel = functools.partial(
        _mha_fused_kernel,
        num_heads=num_heads,
        approx_recip=(jnp.dtype(cd) != jnp.dtype(jnp.float32)),
    )
    return pl.pallas_call(
        kernel,
        out_shape=jax.ShapeDtypeStruct((B, T, C), out_dtype),
        grid=(B // bt,),
        in_specs=[
            pl.BlockSpec((bt, T, C), lambda b: (b, 0, 0)),
            pl.BlockSpec((C, 3 * C), lambda b: (0, 0)),   # resident weights
            pl.BlockSpec((C, C), lambda b: (0, 0)),
            pl.BlockSpec((1, C), lambda b: (0, 0)),
        ],
        out_specs=pl.BlockSpec((bt, T, C), lambda b: (b, 0, 0)),
        compiler_params=pltpu.CompilerParams(
            dimension_semantics=("parallel",),
        ),
    )(x_c, w_qkv, w_proj, b_proj)


# Convenience wrapper (packs per call — prefer pack_mha_params + mha_forward).
def multi_head_attention(x, wq, wk, wv, w_proj, b_proj,
                         compute_dtype=jnp.bfloat16):
    packed = pack_mha_params(wq, wk, wv, w_proj, b_proj, compute_dtype)
    return mha_forward(x, *packed, num_heads=wq.shape[0])


def init_params(key, num_heads=NUM_HEADS, head_size=HEAD_SIZE, n_embd=N_EMBD):
    k1, k2, k3, k4, k5 = jax.random.split(key, 5)
    std = 0.02
    wq = jax.random.normal(k1, (num_heads, n_embd, head_size), jnp.float32) * std
    wk = jax.random.normal(k2, (num_heads, n_embd, head_size), jnp.float32) * std
    wv = jax.random.normal(k3, (num_heads, n_embd, head_size), jnp.float32) * std
    w_proj = jax.random.normal(k4, (n_embd, n_embd), jnp.float32) * std
    b_proj = jax.random.normal(k5, (1, n_embd), jnp.float32) * std
    return wq, wk, wv, w_proj, b_proj


if __name__ == "__main__":
    key = jax.random.PRNGKey(0)
    kx, kp = jax.random.split(key)

    B, T, C = 2, 8, N_EMBD          # small shapes; C is fixed at 128 by the module
    x = jax.random.normal(kx, (B, T, C), jnp.float32)
    wq, wk, wv, w_proj, b_proj = init_params(kp)

    # Pack weights ONCE (scale folded into Q, bf16 MXU operands, f32 bias).
    packed = pack_mha_params(wq, wk, wv, w_proj, b_proj,
                             compute_dtype=jnp.bfloat16)

    out = mha_forward(x, *packed)
    out = jax.block_until_ready(out)
    assert out.shape == (B, T, C), out.shape
    assert bool(jnp.all(jnp.isfinite(out)))
    print("KERNEL_OK")
</pallas_src>

<mosaic_0001>
module attributes {stable_mosaic.version = 11 : i64} {
  func.func @_mha_fused_kernel(%arg0: i32, %arg1: memref<1x8x128xbf16, #tpu.memory_space<vmem>>, %arg2: memref<128x384xbf16, #tpu.memory_space<vmem>>, %arg3: memref<128x128xbf16, #tpu.memory_space<vmem>>, %arg4: memref<1x128xf32, #tpu.memory_space<vmem>>, %arg5: memref<1x8x128xf32, #tpu.memory_space<vmem>>) attributes {dimension_semantics = [#tpu.dimension_semantics<parallel>], iteration_bounds = array<i64: 2>, scalar_prefetch = 0 : i64, scratch_operands = 0 : i64, tpu.core_type = #tpu.core_type<tc>, window_params = [{transform_indices = @transform_0, window_bounds = array<i64: 1, 8, 128>}, {pipeline_mode = #tpu.pipeline_mode<synchronous>, transform_indices = @transform_1, window_bounds = array<i64: 128, 384>}, {pipeline_mode = #tpu.pipeline_mode<synchronous>, transform_indices = @transform_2, window_bounds = array<i64: 128, 128>}, {pipeline_mode = #tpu.pipeline_mode<synchronous>, transform_indices = @transform_3, window_bounds = array<i64: 1, 128>}, {transform_indices = @transform_4, window_bounds = array<i64: 1, 8, 128>}]} {
    %c0 = arith.constant 0 : index
    %c0_0 = arith.constant 0 : index
    %c0_1 = arith.constant 0 : index
    %0 = vector.load %arg1[%c0, %c0_0, %c0_1] : memref<1x8x128xbf16, #tpu.memory_space<vmem>>, vector<1x8x128xbf16>
    %1 = vector.shape_cast %0 : vector<1x8x128xbf16> to vector<8x128xbf16>
    %c0_2 = arith.constant 0 : index
    %c0_3 = arith.constant 0 : index
    %2 = vector.load %arg2[%c0_2, %c0_3] : memref<128x384xbf16, #tpu.memory_space<vmem>>, vector<128x384xbf16>
    %cst = arith.constant dense<0.000000e+00> : vector<8x384xf32>
    %3 = tpu.matmul %1, %2, %cst {dimension_numbers = #tpu.dot_dimension_numbers<[1], [0], [0], [1], [0, 0, 1, 1], [], []>} : vector<8x128xbf16>, vector<128x384xbf16>, vector<8x384xf32> -> vector<8x384xf32>
    %4 = vector.shape_cast %3 : vector<8x384xf32> to vector<1x8x384xf32>
    %5 = arith.truncf %4 : vector<1x8x384xf32> to vector<1x8x384xbf16>
    %6 = vector.extract_strided_slice %5 {offsets = [0, 0, 0], sizes = [1, 8, 128], strides = [1, 1, 1]} : vector<1x8x384xbf16> to vector<1x8x128xbf16>
    %7 = vector.extract_strided_slice %5 {offsets = [0, 0, 128], sizes = [1, 8, 128], strides = [1, 1, 1]} : vector<1x8x384xbf16> to vector<1x8x128xbf16>
    %8 = vector.extract_strided_slice %5 {offsets = [0, 0, 256], sizes = [1, 8, 128], strides = [1, 1, 1]} : vector<1x8x384xbf16> to vector<1x8x128xbf16>
    %9 = tpu.iota {dimensions = array<i32: 0>} : vector<8x8xi32>
    %10 = tpu.iota {dimensions = array<i32: 1>} : vector<8x8xi32>
    %11 = arith.cmpi sle, %10, %9 : vector<8x8xi32>
    %cst_4 = arith.constant 0.000000e+00 : f32
    %cst_5 = arith.constant 0xFF800000 : f32
    %12 = vector.broadcast %cst_4 : f32 to vector<8x8xf32>
    %13 = vector.broadcast %cst_5 : f32 to vector<8x8xf32>
    %14 = arith.select %11, %12, %13 : vector<8x8xi1>, vector<8x8xf32>
    %15 = vector.shape_cast %14 : vector<8x8xf32> to vector<1x8x8xf32>
    %16 = vector.extract_strided_slice %6 {offsets = [0, 0, 0], sizes = [1, 8, 32], strides = [1, 1, 1]} : vector<1x8x128xbf16> to vector<1x8x32xbf16>
    %17 = vector.extract_strided_slice %7 {offsets = [0, 0, 0], sizes = [1, 8, 32], strides = [1, 1, 1]} : vector<1x8x128xbf16> to vector<1x8x32xbf16>
    %18 = vector.extract_strided_slice %8 {offsets = [0, 0, 0], sizes = [1, 8, 32], strides = [1, 1, 1]} : vector<1x8x128xbf16> to vector<1x8x32xbf16>
    "tpu.trace_start"() <{level = 10 : i32, message = "bqd,bkd->bqk"}> : () -> ()
    %cst_6 = arith.constant dense<0.000000e+00> : vector<1x8x8xf32>
    %19 = tpu.matmul %16, %17, %cst_6 {dimension_numbers = #tpu.dot_dimension_numbers<[2], [2], [1], [1], [0, 0, 0, 1, 1, 1], [0], [0]>} : vector<1x8x32xbf16>, vector<1x8x32xbf16>, vector<1x8x8xf32> -> vector<1x8x8xf32>
    "tpu.trace_stop"() : () -> ()
    %20 = arith.addf %19, %15 : vector<1x8x8xf32>
    %cst_7 = arith.constant dense<0xFF800000> : vector<1x8xf32>
    %21 = vector.multi_reduction <maximumf>, %20, %cst_7 [2] : vector<1x8x8xf32> to vector<1x8xf32>
    %22 = vector.shape_cast %21 : vector<1x8xf32> to vector<1x8x1xf32>
    %23 = vector.broadcast %22 : vector<1x8x1xf32> to vector<1x8x8xf32>
    %24 = arith.subf %20, %23 : vector<1x8x8xf32>
    %25 = math.exp %24 : vector<1x8x8xf32>
    %cst_8 = arith.constant dense<0.000000e+00> : vector<1x8xf32>
    %26 = vector.multi_reduction <add>, %25, %cst_8 [2] : vector<1x8x8xf32> to vector<1x8xf32>
    %27 = vector.shape_cast %26 : vector<1x8xf32> to vector<1x8x1xf32>
    %28 = tpu.reciprocal %27 {approx = true} : vector<1x8x1xf32> -> vector<1x8x1xf32>
    %29 = vector.broadcast %28 : vector<1x8x1xf32> to vector<1x8x8xf32>
    %30 = arith.mulf %25, %29 : vector<1x8x8xf32>
    %31 = arith.truncf %30 : vector<1x8x8xf32> to vector<1x8x8xbf16>
    "tpu.trace_start"() <{level = 10 : i32, message = "bqk,bkd->bqd"}> : () -> ()
    %cst_9 = arith.constant dense<0.000000e+00> : vector<1x8x32xf32>
    %32 = tpu.matmul %31, %18, %cst_9 {dimension_numbers = #tpu.dot_dimension_numbers<[2], [1], [1], [2], [0, 0, 0, 1, 1, 2], [0], [0]>} : vector<1x8x8xbf16>, vector<1x8x32xbf16>, vector<1x8x32xf32> -> vector<1x8x32xf32>
    "tpu.trace_stop"() : () -> ()
    %33 = vector.extract_strided_slice %6 {offsets = [0, 0, 32], sizes = [1, 8, 32], strides = [1, 1, 1]} : vector<1x8x128xbf16> to vector<1x8x32xbf16>
    %34 = vector.extract_strided_slice %7 {offsets = [0, 0, 32], sizes = [1, 8, 32], strides = [1, 1, 1]} : vector<1x8x128xbf16> to vector<1x8x32xbf16>
    %35 = vector.extract_strided_slice %8 {offsets = [0, 0, 32], sizes = [1, 8, 32], strides = [1, 1, 1]} : vector<1x8x128xbf16> to vector<1x8x32xbf16>
    "tpu.trace_start"() <{level = 10 : i32, message = "bqd,bkd->bqk"}> : () -> ()
    %cst_10 = arith.constant dense<0.000000e+00> : vector<1x8x8xf32>
    %36 = tpu.matmul %33, %34, %cst_10 {dimension_numbers = #tpu.dot_dimension_numbers<[2], [2], [1], [1], [0, 0, 0, 1, 1, 1], [0], [0]>} : vector<1x8x32xbf16>, vector<1x8x32xbf16>, vector<1x8x8xf32> -> vector<1x8x8xf32>
    "tpu.trace_stop"() : () -> ()
    %37 = arith.addf %36, %15 : vector<1x8x8xf32>
    %cst_11 = arith.constant dense<0xFF800000> : vector<1x8xf32>
    %38 = vector.multi_reduction <maximumf>, %37, %cst_11 [2] : vector<1x8x8xf32> to vector<1x8xf32>
    %39 = vector.shape_cast %38 : vector<1x8xf32> to vector<1x8x1xf32>
    %40 = vector.broadcast %39 : vector<1x8x1xf32> to vector<1x8x8xf32>
    %41 = arith.subf %37, %40 : vector<1x8x8xf32>
    %42 = math.exp %41 : vector<1x8x8xf32>
    %cst_12 = arith.constant dense<0.000000e+00> : vector<1x8xf32>
    %43 = vector.multi_reduction <add>, %42, %cst_12 [2] : vector<1x8x8xf32> to vector<1x8xf32>
    %44 = vector.shape_cast %43 : vector<1x8xf32> to vector<1x8x1xf32>
    %45 = tpu.reciprocal %44 {approx = true} : vector<1x8x1xf32> -> vector<1x8x1xf32>
    %46 = vector.broadcast %45 : vector<1x8x1xf32> to vector<1x8x8xf32>
    %47 = arith.mulf %42, %46 : vector<1x8x8xf32>
    %48 = arith.truncf %47 : vector<1x8x8xf32> to vector<1x8x8xbf16>
    "tpu.trace_start"() <{level = 10 : i32, message = "bqk,bkd->bqd"}> : () -> ()
    %cst_13 = arith.constant dense<0.000000e+00> : vector<1x8x32xf32>
    %49 = tpu.matmul %48, %35, %cst_13 {dimension_numbers = #tpu.dot_dimension_numbers<[2], [1], [1], [2], [0, 0, 0, 1, 1, 2], [0], [0]>} : vector<1x8x8xbf16>, vector<1x8x32xbf16>, vector<1x8x32xf32> -> vector<1x8x32xf32>
    "tpu.trace_stop"() : () -> ()
    %50 = vector.extract_strided_slice %6 {offsets = [0, 0, 64], sizes = [1, 8, 32], strides = [1, 1, 1]} : vector<1x8x128xbf16> to vector<1x8x32xbf16>
    %51 = vector.extract_strided_slice %7 {offsets = [0, 0, 64], sizes = [1, 8, 32], strides = [1, 1, 1]} : vector<1x8x128xbf16> to vector<1x8x32xbf16>
    %52 = vector.extract_strided_slice %8 {offsets = [0, 0, 64], sizes = [1, 8, 32], strides = [1, 1, 1]} : vector<1x8x128xbf16> to vector<1x8x32xbf16>
    "tpu.trace_start"() <{level = 10 : i32, message = "bqd,bkd->bqk"}> : () -> ()
    %cst_14 = arith.constant dense<0.000000e+00> : vector<1x8x8xf32>
    %53 = tpu.matmul %50, %51, %cst_14 {dimension_numbers = #tpu.dot_dimension_numbers<[2], [2], [1], [1], [0, 0, 0, 1, 1, 1], [0], [0]>} : vector<1x8x32xbf16>, vector<1x8x32xbf16>, vector<1x8x8xf32> -> vector<1x8x8xf32>
    "tpu.trace_stop"() : () -> ()
    %54 = arith.addf %53, %15 : vector<1x8x8xf32>
    %cst_15 = arith.constant dense<0xFF800000> : vector<1x8xf32>
    %55 = vector.multi_reduction <maximumf>, %54, %cst_15 [2] : vector<1x8x8xf32> to vector<1x8xf32>
    %56 = vector.shape_cast %55 : vector<1x8xf32> to vector<1x8x1xf32>
    %57 = vector.broadcast %56 : vector<1x8x1xf32> to vector<1x8x8xf32>
    %58 = arith.subf %54, %57 : vector<1x8x8xf32>
    %59 = math.exp %58 : vector<1x8x8xf32>
    %cst_16 = arith.constant dense<0.000000e+00> : vector<1x8xf32>
    %60 = vector.multi_reduction <add>, %59, %cst_16 [2] : vector<1x8x8xf32> to vector<1x8xf32>
    %61 = vector.shape_cast %60 : vector<1x8xf32> to vector<1x8x1xf32>
    %62 = tpu.reciprocal %61 {approx = true} : vector<1x8x1xf32> -> vector<1x8x1xf32>
    %63 = vector.broadcast %62 : vector<1x8x1xf32> to vector<1x8x8xf32>
    %64 = arith.mulf %59, %63 : vector<1x8x8xf32>
    %65 = arith.truncf %64 : vector<1x8x8xf32> to vector<1x8x8xbf16>
    "tpu.trace_start"() <{level = 10 : i32, message = "bqk,bkd->bqd"}> : () -> ()
    %cst_17 = arith.constant dense<0.000000e+00> : vector<1x8x32xf32>
    %66 = tpu.matmul %65, %52, %cst_17 {dimension_numbers = #tpu.dot_dimension_numbers<[2], [1], [1], [2], [0, 0, 0, 1, 1, 2], [0], [0]>} : vector<1x8x8xbf16>, vector<1x8x32xbf16>, vector<1x8x32xf32> -> vector<1x8x32xf32>
    "tpu.trace_stop"() : () -> ()
    %67 = vector.extract_strided_slice %6 {offsets = [0, 0, 96], sizes = [1, 8, 32], strides = [1, 1, 1]} : vector<1x8x128xbf16> to vector<1x8x32xbf16>
    %68 = vector.extract_strided_slice %7 {offsets = [0, 0, 96], sizes = [1, 8, 32], strides = [1, 1, 1]} : vector<1x8x128xbf16> to vector<1x8x32xbf16>
    %69 = vector.extract_strided_slice %8 {offsets = [0, 0, 96], sizes = [1, 8, 32], strides = [1, 1, 1]} : vector<1x8x128xbf16> to vector<1x8x32xbf16>
    "tpu.trace_start"() <{level = 10 : i32, message = "bqd,bkd->bqk"}> : () -> ()
    %cst_18 = arith.constant dense<0.000000e+00> : vector<1x8x8xf32>
    %70 = tpu.matmul %67, %68, %cst_18 {dimension_numbers = #tpu.dot_dimension_numbers<[2], [2], [1], [1], [0, 0, 0, 1, 1, 1], [0], [0]>} : vector<1x8x32xbf16>, vector<1x8x32xbf16>, vector<1x8x8xf32> -> vector<1x8x8xf32>
    "tpu.trace_stop"() : () -> ()
    %71 = arith.addf %70, %15 : vector<1x8x8xf32>
    %cst_19 = arith.constant dense<0xFF800000> : vector<1x8xf32>
    %72 = vector.multi_reduction <maximumf>, %71, %cst_19 [2] : vector<1x8x8xf32> to vector<1x8xf32>
    %73 = vector.shape_cast %72 : vector<1x8xf32> to vector<1x8x1xf32>
    %74 = vector.broadcast %73 : vector<1x8x1xf32> to vector<1x8x8xf32>
    %75 = arith.subf %71, %74 : vector<1x8x8xf32>
    %76 = math.exp %75 : vector<1x8x8xf32>
    %cst_20 = arith.constant dense<0.000000e+00> : vector<1x8xf32>
    %77 = vector.multi_reduction <add>, %76, %cst_20 [2] : vector<1x8x8xf32> to vector<1x8xf32>
    %78 = vector.shape_cast %77 : vector<1x8xf32> to vector<1x8x1xf32>
    %79 = tpu.reciprocal %78 {approx = true} : vector<1x8x1xf32> -> vector<1x8x1xf32>
    %80 = vector.broadcast %79 : vector<1x8x1xf32> to vector<1x8x8xf32>
    %81 = arith.mulf %76, %80 : vector<1x8x8xf32>
    %82 = arith.truncf %81 : vector<1x8x8xf32> to vector<1x8x8xbf16>
    "tpu.trace_start"() <{level = 10 : i32, message = "bqk,bkd->bqd"}> : () -> ()
    %cst_21 = arith.constant dense<0.000000e+00> : vector<1x8x32xf32>
    %83 = tpu.matmul %82, %69, %cst_21 {dimension_numbers = #tpu.dot_dimension_numbers<[2], [1], [1], [2], [0, 0, 0, 1, 1, 2], [0], [0]>} : vector<1x8x8xbf16>, vector<1x8x32xbf16>, vector<1x8x32xf32> -> vector<1x8x32xf32>
    "tpu.trace_stop"() : () -> ()
    %84 = tpu.concatenate %32, %49, %66, %83 in 2 : vector<1x8x32xf32>, vector<1x8x32xf32>, vector<1x8x32xf32>, vector<1x8x32xf32> -> vector<1x8x128xf32>
    %85 = vector.shape_cast %84 : vector<1x8x128xf32> to vector<8x128xf32>
    %86 = arith.truncf %85 : vector<8x128xf32> to vector<8x128xbf16>
    %c0_22 = arith.constant 0 : index
    %c0_23 = arith.constant 0 : index
    %87 = vector.load %arg3[%c0_22, %c0_23] : memref<128x128xbf16, #tpu.memory_space<vmem>>, vector<128x128xbf16>
    %cst_24 = arith.constant dense<0.000000e+00> : vector<8x128xf32>
    %88 = tpu.matmul %86, %87, %cst_24 {dimension_numbers = #tpu.dot_dimension_numbers<[1], [0], [0], [1], [0, 0, 1, 1], [], []>} : vector<8x128xbf16>, vector<128x128xbf16>, vector<8x128xf32> -> vector<8x128xf32>
    %c0_25 = arith.constant 0 : index
    %c0_26 = arith.constant 0 : index
    %89 = vector.load %arg4[%c0_25, %c0_26] : memref<1x128xf32, #tpu.memory_space<vmem>>, vector<1x128xf32>
    %90 = vector.broadcast %89 : vector<1x128xf32> to vector<8x128xf32>
    %91 = arith.addf %88, %90 : vector<8x128xf32>
    %92 = vector.shape_cast %91 : vector<8x128xf32> to vector<1x8x128xf32>
    %c0_27 = arith.constant 0 : index
    %c0_28 = arith.constant 0 : index
    %c0_29 = arith.constant 0 : index
    %93 = vector.load %arg5[%c0_27, %c0_28, %c0_29] : memref<1x8x128xf32, #tpu.memory_space<vmem>>, vector<1x8x128xf32>
    tpu.vector_store %arg5[%c0_27, %c0_28, %c0_29], %92 {strides = array<i32>} : memref<1x8x128xf32, #tpu.memory_space<vmem>>, vector<1x8x128xf32>,
    return
  }
  func.func @transform_0(%arg0: i32) -> (i32, i32, i32) {
    %c0_i32 = arith.constant 0 : i32
    %c0_i32_0 = arith.constant 0 : i32
    %c0_i32_1 = arith.constant 0 : i32
    return %arg0, %c0_i32, %c0_i32_0 : i32, i32, i32
  }
  func.func @transform_1(%arg0: i32) -> (i32, i32) {
    %c0_i32 = arith.constant 0 : i32
    %c0_i32_0 = arith.constant 0 : i32
    %c0_i32_1 = arith.constant 0 : i32
    return %c0_i32, %c0_i32_0 : i32, i32
  }
  func.func @transform_2(%arg0: i32) -> (i32, i32) {
    %c0_i32 = arith.constant 0 : i32
    %c0_i32_0 = arith.constant 0 : i32
    %c0_i32_1 = arith.constant 0 : i32
    return %c0_i32, %c0_i32_0 : i32, i32
  }
  func.func @transform_3(%arg0: i32) -> (i32, i32) {
    %c0_i32 = arith.constant 0 : i32
    %c0_i32_0 = arith.constant 0 : i32
    %c0_i32_1 = arith.constant 0 : i32
    return %c0_i32, %c0_i32_0 : i32, i32
  }
  func.func @transform_4(%arg0: i32) -> (i32, i32, i32) {
    %c0_i32 = arith.constant 0 : i32
    %c0_i32_0 = arith.constant 0 : i32
    %c0_i32_1 = arith.constant 0 : i32
    return %arg0, %c0_i32, %c0_i32_0 : i32, i32, i32
  }
}

</mosaic_0001>

<llo_original>
// kernel: mha_forward.1
$region0: #{mha_forward.1}
  #allocation0 [shape = 'u32[]', space=smem, size = 0x4, offset = 0x4, fixed_abs, tag = 'smem constant byte address 0x4 - core index']
  #allocation1 [shape = 'u32[144,128]{1,0:T(1,128)}', space=vmem, size = 0x12000, scoped, tag = 'internal scratch']
  %s0 = inlined_call_operand.vmem [shape: bf16[2,8,128], index: 0, kind: input, shape index: {}]
  %s1 = inlined_call_operand.hbm [shape: bf16[128,384], index: 1, kind: input, shape index: {}]
  %s2 = inlined_call_operand.hbm [shape: bf16[128,128], index: 2, kind: input, shape index: {}]
  %s3 = inlined_call_operand.vmem [shape: f32[1,128], index: 3, kind: input, shape index: {}]
  %s4 = inlined_call_operand.hbm [shape: f32[2,8,128], index: 4, kind: output, shape index: {}]
  %s5 = sld [smem:[#allocation0]]
  $region57: #{mha_forward.1} parent=0
    _
  %s7 = ssub.s32 1, %s5
  %s8 = scalar_select 0, %s7, %s5
  $region1: #{mha_forward.1} parent=0
    #allocation2 [shape = 'u8[98304]{0}', space=vmem, size = 0x18000, scoped, tag = 'input window, operand 1, single buffered']
    #allocation3 [shape = 's32[2]{0}', space=sflag, size = 0x8, scoped, tag = 'scoped memory for mha_forward.1']
    #allocation4 [shape = 's32[2]{0}', space=sflag, size = 0x8, scoped, tag = 'scoped memory for mha_forward.1']
    #allocation5 [shape = 'u8[32768]{0}', space=vmem, size = 0x8000, scoped, tag = 'input window, operand 2, single buffered']
    #allocation6 [shape = 's32[1]{0}', space=sflag, size = 0x4, scoped, tag = 'scoped memory for mha_forward.1']
    #allocation7 [shape = 'u8[8192]{0}', space=vmem, size = 0x2000, scoped, tag = 'output window, operand 0']
    %9 = vsyncpa [#allocation3], 0
    %10 = vsyncpa [#allocation6], 0
    %11 = vsyncpa [#allocation4], 0
    %s12 = scalar_lea.sflag [#allocation4], 1
    %13 = vsyncpa %s12, 0
    loop: start=0, step=1, limit=4
    $region2: #{mha_forward.1} parent=1 // loop_pre_header
      _
    $region3: #{mha_forward.1} parent=1 // loop_header
      %s15 = sphi 0, %s19
      %p16 = scmp.ge.s32.totalorder %s15, 4
      %s25 = sphi 0, %s27
      %s28 = sphi 0, %s25
      %s29 = sphi 0, %s28
      %s45 = sphi 0, %s29
      %s49 = sphi 0, %s49
      %s51 = sphi 0, %s49
      %s52 = sphi 0, %s51
      %s66 = sphi 0, %s52
      %s70 = sphi 0, %s70
      %s72 = sphi 0, %s70
      %s73 = sphi 0, %s72
      %s87 = sphi 0, %s73
      %s91 = sphi 0, %s91
      %s93 = sphi 0, %s91
      %s94 = sphi 0, %s93
      %s108 = sphi 0, %s94
      %s114 = sphi 0, %s116
      %s117 = sphi 0, %s114
      %s118 = sphi 0, %s117
      %s134 = sphi 0, %s118
    $region4: #{mha_forward.1} parent=1 // loop_header_branch
      %18 = sbr.rel (%p16) target = $region8
    $region5: #{mha_forward.1} parent=1 // loop_body
      %s20 = ssub.s32 %s15, 1
      %s21 = ssub.s32 %s15, 2
      %s22 = sadd.s32 %s15, 1
      %s23 = ssub.s32 %s15, %s22
      %p24 = scmp.eq.s32.totalorder %s23, 0
      %s26 = sadd.s32 %s25, 1
      %s27 = scalar_select %p24, %s25, %s26
      %p30 = pneg %p24
      %p31 = scmp.eq.s32.totalorder %s15, 1
      %p32 = por %p30, %p31
      %p33 = scmp.ne.s32.totalorder %s25, %s28
      %p34 = scmp.eq.s32.totalorder %s15, 0
      %p35 = por %p33, %p34
      %p36 = scmp.ne.s32.totalorder %s25, %s28
      %p37 = scmp.eq.s32.totalorder %s20, 1
      %p38 = por %p36, %p37
      %p39 = scmp.ne.s32.totalorder %s28, %s29
      %p40 = scmp.eq.s32.totalorder %s20, 0
      %p41 = por %p39, %p40
      %p42 = scmp.ne.s32.totalorder %s28, %s29
      %p43 = scmp.eq.s32.totalorder %s21, 1
      %p44 = por %p42, %p43
      %p46 = scmp.ne.s32.totalorder %s29, %s45
      %p47 = scmp.eq.s32.totalorder %s21, 0
      %p48 = por %p46, %p47
      %s50 = sadd.s32 %s49, 1
      %p53 = scmp.eq.s32.totalorder %s15, 1
      %p54 = scmp.ne.s32.totalorder %s49, %s51
      %p55 = scmp.eq.s32.totalorder %s15, 0
      %p56 = por %p54, %p55
      %p57 = scmp.ne.s32.totalorder %s49, %s51
      %p58 = scmp.eq.s32.totalorder %s20, 1
      %p59 = por %p57, %p58
      %p60 = scmp.ne.s32.totalorder %s51, %s52
      %p61 = scmp.eq.s32.totalorder %s20, 0
      %p62 = por %p60, %p61
      %p63 = scmp.ne.s32.totalorder %s51, %s52
      %p64 = scmp.eq.s32.totalorder %s21, 1
      %p65 = por %p63, %p64
      %p67 = scmp.ne.s32.totalorder %s52, %s66
      %p68 = scmp.eq.s32.totalorder %s21, 0
      %p69 = por %p67, %p68
      %s71 = sadd.s32 %s70, 1
      %p74 = scmp.eq.s32.totalorder %s15, 1
      %p75 = scmp.ne.s32.totalorder %s70, %s72
      %p76 = scmp.eq.s32.totalorder %s15, 0
      %p77 = por %p75, %p76
      %p78 = scmp.ne.s32.totalorder %s70, %s72
      %p79 = scmp.eq.s32.totalorder %s20, 1
      %p80 = por %p78, %p79
      %p81 = scmp.ne.s32.totalorder %s72, %s73
      %p82 = scmp.eq.s32.totalorder %s20, 0
      %p83 = por %p81, %p82
      %p84 = scmp.ne.s32.totalorder %s72, %s73
      %p85 = scmp.eq.s32.totalorder %s21, 1
      %p86 = por %p84, %p85
      %p88 = scmp.ne.s32.totalorder %s73, %s87
      %p89 = scmp.eq.s32.totalorder %s21, 0
      %p90 = por %p88, %p89
      %s92 = sadd.s32 %s91, 1
      %p95 = scmp.eq.s32.totalorder %s15, 1
      %p96 = scmp.ne.s32.totalorder %s91, %s93
      %p97 = scmp.eq.s32.totalorder %s15, 0
      %p98 = por %p96, %p97
      %p99 = scmp.ne.s32.totalorder %s91, %s93
      %p100 = scmp.eq.s32.totalorder %s20, 1
      %p101 = por %p99, %p100
      %p102 = scmp.ne.s32.totalorder %s93, %s94
      %p103 = scmp.eq.s32.totalorder %s20, 0
      %p104 = por %p102, %p103
      %p105 = scmp.ne.s32.totalorder %s93, %s94
      %p106 = scmp.eq.s32.totalorder %s21, 1
      %p107 = por %p105, %p106
      %p109 = scmp.ne.s32.totalorder %s94, %s108
      %p110 = scmp.eq.s32.totalorder %s21, 0
      %p111 = por %p109, %p110
      %s112 = ssub.s32 %s15, %s22
      %p113 = scmp.eq.s32.totalorder %s112, 0
      %s115 = sadd.s32 %s114, 1
      %s116 = scalar_select %p113, %s114, %s115
      %p119 = pneg %p113
      %p120 = scmp.eq.s32.totalorder %s15, 1
      %p121 = por %p119, %p120
      %p122 = scmp.ne.s32.totalorder %s114, %s117
      %p123 = scmp.eq.s32.totalorder %s15, 0
      %p124 = por %p122, %p123
      %p125 = scmp.ne.s32.totalorder %s114, %s117
      %p126 = scmp.eq.s32.totalorder %s20, 1
      %p127 = por %p125, %p126
      %p128 = scmp.ne.s32.totalorder %s117, %s118
      %p129 = scmp.eq.s32.totalorder %s20, 0
      %p130 = por %p128, %p129
      %p131 = scmp.ne.s32.totalorder %s117, %s118
      %p132 = scmp.eq.s32.totalorder %s21, 1
      %p133 = por %p131, %p132
      %p135 = scmp.ne.s32.totalorder %s118, %s134
      %p136 = scmp.eq.s32.totalorder %s21, 0
      %p137 = por %p135, %p136
      %p138 = scmp.le.s32.totalorder 1, %s15
      %p139 = scmp.lt.s32.totalorder %s15, 3
      %p140 = pnand %p138, %p139
      %p141 = pneg %p140
      // Predicated region
      $region9: #{mha_forward.1} parent=5 // pred_check
        _
      $region10: #{mha_forward.1} parent=5 // pred_check_branch
        %143 = sbr.rel (%p140) target = $region12
      $region11: #{mha_forward.1} parent=5 // pred_region
        %s144 = ssub.s32 %s15, 1
        // Predicated region
        $region13: #{mha_forward.1} parent=11 // pred_check
          %p145 = pneg %p62
        $region14: #{mha_forward.1} parent=11 // pred_check_branch
          %147 = sbr.rel (%p145) target = $region16
        $region15: #{mha_forward.1} parent=11 // pred_region
          %s149 = ssub.s32 3072, 3072
          %150 = vsyncadd [#allocation3], %s149
          %s151 = sshll.u32 [#allocation2], 4
          %s152 = int_to_ptr.vmem [resolvable:$true] %s151
          %157 = dma.hbm_to_vmem [thread:$0]  %s1, 3072, %s152, [#allocation3], 192, 192, 12
        $region16: #{mha_forward.1} parent=11 // pred_fallthru
          _
        // Predicated region
        $region17: #{mha_forward.1} parent=11 // pred_check
          %p158 = pneg %p83
        $region18: #{mha_forward.1} parent=11 // pred_check_branch
          %160 = sbr.rel (%p158) target = $region20
        $region19: #{mha_forward.1} parent=11 // pred_region
          %s162 = ssub.s32 1024, 1024
          %163 = vsyncadd [#allocation6], %s162
          %s164 = sshll.u32 [#allocation5], 4
          %s165 = int_to_ptr.vmem [resolvable:$true] %s164
          %170 = dma.hbm_to_vmem [thread:$0]  %s2, 1024, %s165, [#allocation6], 64, 64, 4
        $region20: #{mha_forward.1} parent=11 // pred_fallthru
          _
        // Predicated region
        $region21: #{mha_forward.1} parent=11 // pred_check
          %p171 = pneg %p104
        $region22: #{mha_forward.1} parent=11 // pred_check_branch
          %173 = sbr.rel (%p171) target = $region24
        $region23: #{mha_forward.1} parent=11 // pred_region
          _
        $region24: #{mha_forward.1} parent=11 // pred_fallthru
          _
      $region12: #{mha_forward.1} parent=5 // pred_fallthru
        _
      %p174 = scmp.lt.s32.totalorder %s15, 2
      // Predicated region
      $region25: #{mha_forward.1} parent=5 // pred_check
        %p175 = pneg %p174
      $region26: #{mha_forward.1} parent=5 // pred_check_branch
        %177 = sbr.rel (%p175) target = $region28
      $region27: #{mha_forward.1} parent=5 // pred_region
        // Predicated region
        $region29: #{mha_forward.1} parent=27 // pred_check
          %p178 = pneg %p35
        $region30: #{mha_forward.1} parent=27 // pred_check_branch
          %180 = sbr.rel (%p178) target = $region32
        $region31: #{mha_forward.1} parent=27 // pred_region
          %p181 = scmp.lt.s32.totalorder %s15, 1
          %s182 = scalar_select %p181, %s15, 1
          %s183 = smul.addr %s182, 4
          %s184 = scalar_lea.vmem %s0, %s183
        $region32: #{mha_forward.1} parent=27 // pred_fallthru
          _
      $region28: #{mha_forward.1} parent=5 // pred_fallthru
        _
      %p185 = scmp.le.s32.totalorder 1, %s15
      %p186 = scmp.lt.s32.totalorder %s15, 3
      %p187 = pnand %p185, %p186
      %p188 = pneg %p187
      // Predicated region
      $region33: #{mha_forward.1} parent=5 // pred_check
        _
      $region34: #{mha_forward.1} parent=5 // pred_check_branch
        %190 = sbr.rel (%p187) target = $region36
      $region35: #{mha_forward.1} parent=5 // pred_region
        %s191 = ssub.s32 %s15, 1
        // Predicated region
        $region37: #{mha_forward.1} parent=35 // pred_check
          %p192 = pneg %p62
        $region38: #{mha_forward.1} parent=35 // pred_check_branch
          %194 = sbr.rel (%p192) target = $region40
        $region39: #{mha_forward.1} parent=35 // pred_region
          %195 = dma.done [#allocation3], 3072
        $region40: #{mha_forward.1} parent=35 // pred_fallthru
          _
        // Predicated region
        $region41: #{mha_forward.1} parent=35 // pred_check
          %p196 = pneg %p83
        $region42: #{mha_forward.1} parent=35 // pred_check_branch
          %198 = sbr.rel (%p196) target = $region44
        $region43: #{mha_forward.1} parent=35 // pred_region
          %199 = dma.done [#allocation6], 1024
        $region44: #{mha_forward.1} parent=35 // pred_fallthru
          _
        %p200 = scmp.lt.s32.totalorder %s20, 1
        %s201 = scalar_select %p200, %s20, 1
        %s202 = smul.addr %s201, 4
        %s203 = scalar_lea.vmem %s0, %s202
        %p204 = pneg %p41
        %p205 = pneg %p38
        %p206 = pneg %p62
        %p207 = pneg %p59
        %p208 = pneg %p83
        %p209 = pneg %p80
        %p210 = pneg %p104
        %p211 = pneg %p101
        %p212 = pneg %p130
        %p213 = pneg %p127
        %s214 = sand.u32 %s117, 1
        %s215 = scalar_lea.sflag [#allocation4], %s214
        %s216 = sand.u32 %s117, 1
        %s217 = smul.addr %s216, 8
        %s218 = scalar_lea.vmem [#allocation7], %s217
        %p219 = scmp.lt.s32.totalorder %s20, 1
        %s220 = scalar_select %p219, %s20, 1
        %s221 = smul.addr %s220, 4
        %s222 = scalar_lea.vmem %s0, %s221
        %v224 = vld [vmem:[%s222] sm:$0xf]
        %v225 = vld [vmem:[#allocation2] sm:$0xff]
        %v226 = vld [vmem:[#allocation2 + $0x8] sm:$0xf]
        %v227 = vld [vmem:[#allocation2 + $0xc] sm:$0xff]
        %v228 = vld [vmem:[#allocation2 + $0x14] sm:$0xf]
        %v229 = vld [vmem:[#allocation2 + $0x18] sm:$0xff]
        %v230 = vld [vmem:[#allocation2 + $0x20] sm:$0xf]
        %v231 = vld [vmem:[#allocation2 + $0x24] sm:$0xff]
        %v232 = vld [vmem:[#allocation2 + $0x2c] sm:$0xf]
        %v233 = vld [vmem:[#allocation2 + $0x30] sm:$0xff]
        %v234 = vld [vmem:[#allocation2 + $0x38] sm:$0xf]
        %v235 = vld [vmem:[#allocation2 + $0x3c] sm:$0xff]
        %v236 = vld [vmem:[#allocation2 + $0x44] sm:$0xf]
        %v237 = vld [vmem:[#allocation2 + $0x48] sm:$0xff]
        %v238 = vld [vmem:[#allocation2 + $0x50] sm:$0xf]
        %v239 = vld [vmem:[#allocation2 + $0x54] sm:$0xff]
        %v240 = vld [vmem:[#allocation2 + $0x5c] sm:$0xf]
        %v241 = vld [vmem:[#allocation2 + $0x60] sm:$0xff]
        %v242 = vld [vmem:[#allocation2 + $0x68] sm:$0xf]
        %v243 = vld [vmem:[#allocation2 + $0x6c] sm:$0xff]
        %v244 = vld [vmem:[#allocation2 + $0x74] sm:$0xf]
        %v245 = vld [vmem:[#allocation2 + $0x78] sm:$0xff]
        %v246 = vld [vmem:[#allocation2 + $0x80] sm:$0xf]
        %v247 = vld [vmem:[#allocation2 + $0x84] sm:$0xff]
        %v248 = vld [vmem:[#allocation2 + $0x8c] sm:$0xf]
        %v249 = vld [vmem:[#allocation2 + $0x90] sm:$0xff]
        %v250 = vld [vmem:[#allocation2 + $0x98] sm:$0xf]
        %v251 = vld [vmem:[#allocation2 + $0x9c] sm:$0xff]
        %v252 = vld [vmem:[#allocation2 + $0xa4] sm:$0xf]
        %v253 = vld [vmem:[#allocation2 + $0xa8] sm:$0xff]
        %v254 = vld [vmem:[#allocation2 + $0xb0] sm:$0xf]
        %v255 = vld [vmem:[#allocation2 + $0xb4] sm:$0xff]
        %v256 = vld [vmem:[#allocation2 + $0xbc] sm:$0xf]
        %v289 = vunpack.c.l.b16 %v225
        %v290 = vunpack.c.h.b16 %v225
        %v291 = vunpack.c.l.b16 %v226
        %v292 = vunpack.c.l.b16 %v227
        %v293 = vunpack.c.h.b16 %v227
        %v294 = vunpack.c.l.b16 %v228
        %v295 = vunpack.c.l.b16 %v229
        %v296 = vunpack.c.h.b16 %v229
        %v297 = vunpack.c.l.b16 %v230
        %v298 = vunpack.c.l.b16 %v231
        %v299 = vunpack.c.h.b16 %v231
        %v300 = vunpack.c.l.b16 %v232
        %v301 = vunpack.c.l.b16 %v233
        %v302 = vunpack.c.h.b16 %v233
        %v303 = vunpack.c.l.b16 %v234
        %v304 = vunpack.c.l.b16 %v235
        %v305 = vunpack.c.h.b16 %v235
        %v306 = vunpack.c.l.b16 %v236
        %v307 = vunpack.c.l.b16 %v237
        %v308 = vunpack.c.h.b16 %v237
        %v309 = vunpack.c.l.b16 %v238
        %v310 = vunpack.c.l.b16 %v239
        %v311 = vunpack.c.h.b16 %v239
        %v312 = vunpack.c.l.b16 %v240
        %v313 = vunpack.c.l.b16 %v241
        %v314 = vunpack.c.h.b16 %v241
        %v315 = vunpack.c.l.b16 %v242
        %v316 = vunpack.c.l.b16 %v243
        %v317 = vunpack.c.h.b16 %v243
        %v318 = vunpack.c.l.b16 %v244
        %v319 = vunpack.c.l.b16 %v245
        %v320 = vunpack.c.h.b16 %v245
        %v321 = vunpack.c.l.b16 %v246
        %v322 = vunpack.c.l.b16 %v247
        %v323 = vunpack.c.h.b16 %v247
        %v324 = vunpack.c.l.b16 %v248
        %v325 = vunpack.c.l.b16 %v249
        %v326 = vunpack.c.h.b16 %v249
        %v327 = vunpack.c.l.b16 %v250
        %v328 = vunpack.c.l.b16 %v251
        %v329 = vunpack.c.h.b16 %v251
        %v330 = vunpack.c.l.b16 %v252
        %v331 = vunpack.c.l.b16 %v253
        %v332 = vunpack.c.h.b16 %v253
        %v333 = vunpack.c.l.b16 %v254
        %v334 = vunpack.c.l.b16 %v255
        %v335 = vunpack.c.h.b16 %v255
        %v336 = vunpack.c.l.b16 %v256
        %v337 = vpack.c.b16 %v292, %v289
        %v338 = vpack.c.b16 %v293, %v290
        %v339 = vpack.c.b16 %v294, %v291
        %v340 = vpack.c.b16 %v298, %v295
        %v341 = vpack.c.b16 %v299, %v296
        %v342 = vpack.c.b16 %v300, %v297
        %v343 = vpack.c.b16 %v304, %v301
        %v344 = vpack.c.b16 %v305, %v302
        %v345 = vpack.c.b16 %v306, %v303
        %v346 = vpack.c.b16 %v310, %v307
        %v347 = vpack.c.b16 %v311, %v308
        %v348 = vpack.c.b16 %v312, %v309
        %v349 = vpack.c.b16 %v316, %v313
        %v350 = vpack.c.b16 %v317, %v314
        %v351 = vpack.c.b16 %v318, %v315
        %v352 = vpack.c.b16 %v322, %v319
        %v353 = vpack.c.b16 %v323, %v320
        %v354 = vpack.c.b16 %v324, %v321
        %v355 = vpack.c.b16 %v328, %v325
        %v356 = vpack.c.b16 %v329, %v326
        %v357 = vpack.c.b16 %v330, %v327
        %v358 = vpack.c.b16 %v334, %v331
        %v359 = vpack.c.b16 %v335, %v332
        %v360 = vpack.c.b16 %v336, %v333
        %385 = vmatprep.subr.bf16.mxu0 %v338
        %386 = vmatpush1.bf16.msra.mxu0 %v337
        %387 = vmatprep.subr.bf16.mxu0 %v341
        %388 = vmatpush1.bf16.msra.mxu0 %v340
        %389 = vmatprep.subr.bf16.mxu0 %v344
        %390 = vmatpush1.bf16.msra.mxu0 %v343
        %391 = vmatprep.subr.bf16.mxu0 %v347
        %392 = vmatpush1.bf16.msra.mxu0 %v346
        %393 = vmatprep.subr.bf16.mxu0 %v350
        %394 = vmatpush1.bf16.msra.mxu0 %v349
        %395 = vmatprep.subr.bf16.mxu0 %v353
        %396 = vmatpush1.bf16.msra.mxu0 %v352
        %397 = vmatprep.subr.bf16.mxu0 %v356
        %398 = vmatpush1.bf16.msra.mxu0 %v355
        %399 = vmatprep.subr.bf16.mxu0 %v359
        %400 = vmatpush1.bf16.msra.mxu0 %v358
        %401 = vmatprep.subr.bf16.mxu0 0
        %402 = vmatpush1.bf16.msra.mxu0 0
        %403 = vmatprep.subr.bf16.mxu0 0
        %404 = vmatpush1.bf16.msra.mxu0 0
        %405 = vmatprep.subr.bf16.mxu0 0
        %406 = vmatpush1.bf16.msra.mxu0 0
        %407 = vmatprep.subr.bf16.mxu0 0
        %408 = vmatpush1.bf16.msra.mxu0 0
        %409 = vmatprep.subr.bf16.mxu0 0
        %410 = vmatpush1.bf16.msra.mxu0 0
        %411 = vmatprep.subr.bf16.mxu0 0
        %412 = vmatpush1.bf16.msra.mxu0 0
        %413 = vmatprep.subr.bf16.mxu0 0
        %414 = vmatpush1.bf16.msra.mxu0 0
        %415 = vmatprep.subr.bf16.mxu0 0
        %416 = vmatpush1.bf16.msra.mxu0 0
        %417 = vmatprep.mubr.bf16.mxu0 0
        %418 = vmatmul.mubr.bf16.gmra.mrb[0].mxu0 %v224
        %v419 = vpop.f32.mrb[0].mxu0
        %v420 = vadd.f32 0.0, %v419
        %v421 = vpop.f32.mrb[0].mxu0
        %v422 = vadd.f32 0.0, %v421
        %v423 = vpop.f32.mrb[0].mxu0
        %v424 = vpop.f32.mrb[0].mxu0
        %425 = vdwg.mxu0
        %426 = vmatprep.subr.bf16.mxu0 0
        %427 = vmatpush1.bf16.msra.mxu0 %v339
        %428 = vmatprep.subr.bf16.mxu0 0
        %429 = vmatpush1.bf16.msra.mxu0 %v342
        %430 = vmatprep.subr.bf16.mxu0 0
        %431 = vmatpush1.bf16.msra.mxu0 %v345
        %432 = vmatprep.subr.bf16.mxu0 0
        %433 = vmatpush1.bf16.msra.mxu0 %v348
        %434 = vmatprep.subr.bf16.mxu0 0
        %435 = vmatpush1.bf16.msra.mxu0 %v351
        %436 = vmatprep.subr.bf16.mxu0 0
        %437 = vmatpush1.bf16.msra.mxu0 %v354
        %438 = vmatprep.subr.bf16.mxu0 0
        %439 = vmatpush1.bf16.msra.mxu0 %v357
        %440 = vmatprep.subr.bf16.mxu0 0
        %441 = vmatpush1.bf16.msra.mxu0 %v360
        %442 = vmatprep.subr.bf16.mxu0 0
        %443 = vmatpush1.bf16.msra.mxu0 0
        %444 = vmatprep.subr.bf16.mxu0 0
        %445 = vmatpush1.bf16.msra.mxu0 0
        %446 = vmatprep.subr.bf16.mxu0 0
        %447 = vmatpush1.bf16.msra.mxu0 0
        %448 = vmatprep.subr.bf16.mxu0 0
        %449 = vmatpush1.bf16.msra.mxu0 0
        %450 = vmatprep.subr.bf16.mxu0 0
        %451 = vmatpush1.bf16.msra.mxu0 0
        %452 = vmatprep.subr.bf16.mxu0 0
        %453 = vmatpush1.bf16.msra.mxu0 0
        %454 = vmatprep.subr.bf16.mxu0 0
        %455 = vmatpush1.bf16.msra.mxu0 0
        %456 = vmatprep.subr.bf16.mxu0 0
        %457 = vmatpush1.bf16.msra.mxu0 0
        %458 = vmatprep.mubr.bf16.mxu0 0
        %459 = vmatmul.mubr.bf16.gmra.mrb[0].mxu0 %v224
        %v460 = vpop.f32.mrb[0].mxu0
        %v461 = vadd.f32 0.0, %v460
        %v462 = vpop.f32.mrb[0].mxu0
        %v463 = vpop.f32.mrb[0].mxu0
        %v464 = vpop.f32.mrb[0].mxu0
        %465 = vdwg.mxu0
        %v466 = vpack.c.bf16 %v420, %v420
        %v467 = vpack.c.bf16 %v422, %v422
        %v468 = vpack.c.bf16 %v461, %v461
        %v469 = vlaneseq
        %v470 = vshrl.u32 %v469, 7
        %v471 = vlaneseq
        %v472 = vand.u32 %v471, 127
        %vm473 = vcmp.le.s32.totalorder %v472, %v470
        %v474 = vsel %vm473, 0.0, -inf
        %vm475 = vcmask 261120
        %v477 = vsel %vm475, %v466, 0
        %v480 = vsel %vm475, %v467, 0
        %482 = vmatprep.subr.bf16.mxu0 0
        %483 = vmatpush1.bf16.xpose.msra.mxu0 %v480
        %484 = vmatprep.subr.bf16.mxu0 0
        %485 = vmatpush1.bf16.xpose.msra.mxu0 0
        %486 = vmatprep.subr.bf16.mxu0 0
        %487 = vmatpush1.bf16.xpose.msra.mxu0 0
        %488 = vmatprep.subr.bf16.mxu0 0
        %489 = vmatpush1.bf16.xpose.msra.mxu0 0
        %490 = vmatprep.subr.bf16.mxu0 0
        %491 = vmatpush1.bf16.xpose.msra.mxu0 0
        %492 = vmatprep.subr.bf16.mxu0 0
        %493 = vmatpush1.bf16.xpose.msra.mxu0 0
        %494 = vmatprep.subr.bf16.mxu0 0
        %495 = vmatpush1.bf16.xpose.msra.mxu0 0
        %496 = vmatprep.subr.bf16.mxu0 0
        %497 = vmatpush1.bf16.xpose.msra.mxu0 0
        %498 = vmatprep.subr.bf16.mxu0 0
        %499 = vmatpush1.bf16.xpose.msra.mxu0 0
        %500 = vmatprep.subr.bf16.mxu0 0
        %501 = vmatpush1.bf16.xpose.msra.mxu0 0
        %502 = vmatprep.subr.bf16.mxu0 0
        %503 = vmatpush1.bf16.xpose.msra.mxu0 0
        %504 = vmatprep.subr.bf16.mxu0 0
        %505 = vmatpush1.bf16.xpose.msra.mxu0 0
        %506 = vmatprep.subr.bf16.mxu0 0
        %507 = vmatpush1.bf16.xpose.msra.mxu0 0
        %508 = vmatprep.subr.bf16.mxu0 0
        %509 = vmatpush1.bf16.xpose.msra.mxu0 0
        %510 = vmatprep.subr.bf16.mxu0 0
        %511 = vmatpush1.bf16.xpose.msra.mxu0 0
        %512 = vmatprep.subr.bf16.mxu0 0
        %513 = vmatpush1.bf16.xpose.msra.mxu0 0
        %514 = vmatprep.mubr.bf16.mxu0 0
        %515 = vmatmul.mubr.bf16.gmra.mrb[0].mxu0 %v477
        %v516 = vpop.f32.mrb[0].mxu0
        %v517 = vadd.f32 %v474, %v516
        %v518 = vpop.f32.mrb[0].mxu0
        %v519 = vpop.f32.mrb[0].mxu0
        %v520 = vpop.f32.mrb[0].mxu0
        %521 = vdwg.mxu0
        %vm522 = vcmask 64512
        %v523 = vsel %vm522, %v517, -inf
        %524 = vmax.xlane.f32.xlu0 %v523
        %v525 = vpop.xlane.xlu0 %524
        %v526 = vsub.f32 %v517, %v525
        %v527 = vmul.f32 %v526, 1.442695
        %v528 = vpow.pop %v527
        %v529 = vsel %vm522, %v528, 0.0
        %530 = vadd.xlane.f32.xlu0 %v529
        %v531 = vpop.xlane.xlu0 %530
        %v532 = vrcp.pop %v531
        %v533 = vmul.f32 %v528, %v532
        %v534 = vpack.c.bf16 %v533, %v533
        %v536 = vsel %vm522, %v534, 0
        %vm538 = vcmask 1043456
        %v540 = vsel %vm538, %v468, 0
        %542 = vmatprep.subr.bf16.mxu0 0
        %543 = vmatpush1.bf16.msra.mxu0 %v540
        %544 = vmatprep.subr.bf16.mxu0 0
        %545 = vmatpush1.bf16.msra.mxu0 0
        %546 = vmatprep.subr.bf16.mxu0 0
        %547 = vmatpush1.bf16.msra.mxu0 0
        %548 = vmatprep.subr.bf16.mxu0 0
        %549 = vmatpush1.bf16.msra.mxu0 0
        %550 = vmatprep.subr.bf16.mxu0 0
        %551 = vmatpush1.bf16.msra.mxu0 0
        %552 = vmatprep.subr.bf16.mxu0 0
        %553 = vmatpush1.bf16.msra.mxu0 0
        %554 = vmatprep.subr.bf16.mxu0 0
        %555 = vmatpush1.bf16.msra.mxu0 0
        %556 = vmatprep.subr.bf16.mxu0 0
        %557 = vmatpush1.bf16.msra.mxu0 0
        %558 = vmatprep.subr.bf16.mxu0 0
        %559 = vmatpush1.bf16.msra.mxu0 0
        %560 = vmatprep.subr.bf16.mxu0 0
        %561 = vmatpush1.bf16.msra.mxu0 0
        %562 = vmatprep.subr.bf16.mxu0 0
        %563 = vmatpush1.bf16.msra.mxu0 0
        %564 = vmatprep.subr.bf16.mxu0 0
        %565 = vmatpush1.bf16.msra.mxu0 0
        %566 = vmatprep.subr.bf16.mxu0 0
        %567 = vmatpush1.bf16.msra.mxu0 0
        %568 = vmatprep.subr.bf16.mxu0 0
        %569 = vmatpush1.bf16.msra.mxu0 0
        %570 = vmatprep.subr.bf16.mxu0 0
        %571 = vmatpush1.bf16.msra.mxu0 0
        %572 = vmatprep.subr.bf16.mxu0 0
        %573 = vmatpush1.bf16.msra.mxu0 0
        %574 = vmatprep.mubr.bf16.mxu0 0
        %575 = vmatmul.mubr.bf16.gmra.mrb[0].mxu0 %v536
        %v576 = vpop.f32.mrb[0].mxu0
        %v577 = vadd.f32 0.0, %v576
        %v578 = vpop.f32.mrb[0].mxu0
        %v579 = vpop.f32.mrb[0].mxu0
        %v580 = vpop.f32.mrb[0].mxu0
        %581 = vdwg.mxu0
        %583 = vrot.lane.b32.xlu0 %v466, 96
        %v584 = vpop.permute.xlu0 %583
        %586 = vrot.lane.b32.xlu0 %v467, 96
        %v587 = vpop.permute.xlu0 %586
        %v589 = vsel %vm475, %v584, 0
        %v592 = vsel %vm475, %v587, 0
        %594 = vmatprep.subr.bf16.mxu0 0
        %595 = vmatpush1.bf16.xpose.msra.mxu0 %v592
        %596 = vmatprep.subr.bf16.mxu0 0
        %597 = vmatpush1.bf16.xpose.msra.mxu0 0
        %598 = vmatprep.subr.bf16.mxu0 0
        %599 = vmatpush1.bf16.xpose.msra.mxu0 0
        %600 = vmatprep.subr.bf16.mxu0 0
        %601 = vmatpush1.bf16.xpose.msra.mxu0 0
        %602 = vmatprep.subr.bf16.mxu0 0
        %603 = vmatpush1.bf16.xpose.msra.mxu0 0
        %604 = vmatprep.subr.bf16.mxu0 0
        %605 = vmatpush1.bf16.xpose.msra.mxu0 0
        %606 = vmatprep.subr.bf16.mxu0 0
        %607 = vmatpush1.bf16.xpose.msra.mxu0 0
        %608 = vmatprep.subr.bf16.mxu0 0
        %609 = vmatpush1.bf16.xpose.msra.mxu0 0
        %610 = vmatprep.subr.bf16.mxu0 0
        %611 = vmatpush1.bf16.xpose.msra.mxu0 0
        %612 = vmatprep.subr.bf16.mxu0 0
        %613 = vmatpush1.bf16.xpose.msra.mxu0 0
        %614 = vmatprep.subr.bf16.mxu0 0
        %615 = vmatpush1.bf16.xpose.msra.mxu0 0
        %616 = vmatprep.subr.bf16.mxu0 0
        %617 = vmatpush1.bf16.xpose.msra.mxu0 0
        %618 = vmatprep.subr.bf16.mxu0 0
        %619 = vmatpush1.bf16.xpose.msra.mxu0 0
        %620 = vmatprep.subr.bf16.mxu0 0
        %621 = vmatpush1.bf16.xpose.msra.mxu0 0
        %622 = vmatprep.subr.bf16.mxu0 0
        %623 = vmatpush1.bf16.xpose.msra.mxu0 0
        %624 = vmatprep.subr.bf16.mxu0 0
        %625 = vmatpush1.bf16.xpose.msra.mxu0 0
        %626 = vmatprep.mubr.bf16.mxu0 0
        %627 = vmatmul.mubr.bf16.gmra.mrb[0].mxu0 %v589
        %v628 = vpop.f32.mrb[0].mxu0
        %v629 = vadd.f32 %v474, %v628
        %v630 = vpop.f32.mrb[0].mxu0
        %v631 = vpop.f32.mrb[0].mxu0
        %v632 = vpop.f32.mrb[0].mxu0
        %633 = vdwg.mxu0
        %v634 = vsel %vm522, %v629, -inf
        %635 = vmax.xlane.f32.xlu0 %v634
        %v636 = vpop.xlane.xlu0 %635
        %v637 = vsub.f32 %v629, %v636
        %v638 = vmul.f32 %v637, 1.442695
        %v639 = vpow.pop %v638
        %v640 = vsel %vm522, %v639, 0.0
        %641 = vadd.xlane.f32.xlu0 %v640
        %v642 = vpop.xlane.xlu0 %641
        %v643 = vrcp.pop %v642
        %v644 = vmul.f32 %v639, %v643
        %v645 = vpack.c.bf16 %v644, %v644
        %647 = vrot.lane.b32.xlu0 %v468, 96
        %v648 = vpop.permute.xlu0 %647
        %v650 = vsel %vm522, %v645, 0
        %v653 = vsel %vm538, %v648, 0
        %655 = vmatprep.subr.bf16.mxu0 0
        %656 = vmatpush1.bf16.msra.mxu0 %v653
        %657 = vmatprep.subr.bf16.mxu0 0
        %658 = vmatpush1.bf16.msra.mxu0 0
        %659 = vmatprep.subr.bf16.mxu0 0
        %660 = vmatpush1.bf16.msra.mxu0 0
        %661 = vmatprep.subr.bf16.mxu0 0
        %662 = vmatpush1.bf16.msra.mxu0 0
        %663 = vmatprep.subr.bf16.mxu0 0
        %664 = vmatpush1.bf16.msra.mxu0 0
        %665 = vmatprep.subr.bf16.mxu0 0
        %666 = vmatpush1.bf16.msra.mxu0 0
        %667 = vmatprep.subr.bf16.mxu0 0
        %668 = vmatpush1.bf16.msra.mxu0 0
        %669 = vmatprep.subr.bf16.mxu0 0
        %670 = vmatpush1.bf16.msra.mxu0 0
        %671 = vmatprep.subr.bf16.mxu0 0
        %672 = vmatpush1.bf16.msra.mxu0 0
        %673 = vmatprep.subr.bf16.mxu0 0
        %674 = vmatpush1.bf16.msra.mxu0 0
        %675 = vmatprep.subr.bf16.mxu0 0
        %676 = vmatpush1.bf16.msra.mxu0 0
        %677 = vmatprep.subr.bf16.mxu0 0
        %678 = vmatpush1.bf16.msra.mxu0 0
        %679 = vmatprep.subr.bf16.mxu0 0
        %680 = vmatpush1.bf16.msra.mxu0 0
        %681 = vmatprep.subr.bf16.mxu0 0
        %682 = vmatpush1.bf16.msra.mxu0 0
        %683 = vmatprep.subr.bf16.mxu0 0
        %684 = vmatpush1.bf16.msra.mxu0 0
        %685 = vmatprep.subr.bf16.mxu0 0
        %686 = vmatpush1.bf16.msra.mxu0 0
        %687 = vmatprep.mubr.bf16.mxu0 0
        %688 = vmatmul.mubr.bf16.gmra.mrb[0].mxu0 %v650
        %v689 = vpop.f32.mrb[0].mxu0
        %v690 = vadd.f32 0.0, %v689
        %v691 = vpop.f32.mrb[0].mxu0
        %v692 = vpop.f32.mrb[0].mxu0
        %v693 = vpop.f32.mrb[0].mxu0
        %694 = vdwg.mxu0
        %695 = vrot.lane.b32.xlu0 %v466, 64
        %v696 = vpop.permute.xlu0 %695
        %697 = vrot.lane.b32.xlu0 %v467, 64
        %v698 = vpop.permute.xlu0 %697
        %v700 = vsel %vm475, %v696, 0
        %v703 = vsel %vm475, %v698, 0
        %705 = vmatprep.subr.bf16.mxu0 0
        %706 = vmatpush1.bf16.xpose.msra.mxu0 %v703
        %707 = vmatprep.subr.bf16.mxu0 0
        %708 = vmatpush1.bf16.xpose.msra.mxu0 0
        %709 = vmatprep.subr.bf16.mxu0 0
        %710 = vmatpush1.bf16.xpose.msra.mxu0 0
        %711 = vmatprep.subr.bf16.mxu0 0
        %712 = vmatpush1.bf16.xpose.msra.mxu0 0
        %713 = vmatprep.subr.bf16.mxu0 0
        %714 = vmatpush1.bf16.xpose.msra.mxu0 0
        %715 = vmatprep.subr.bf16.mxu0 0
        %716 = vmatpush1.bf16.xpose.msra.mxu0 0
        %717 = vmatprep.subr.bf16.mxu0 0
        %718 = vmatpush1.bf16.xpose.msra.mxu0 0
        %719 = vmatprep.subr.bf16.mxu0 0
        %720 = vmatpush1.bf16.xpose.msra.mxu0 0
        %721 = vmatprep.subr.bf16.mxu0 0
        %722 = vmatpush1.bf16.xpose.msra.mxu0 0
        %723 = vmatprep.subr.bf16.mxu0 0
        %724 = vmatpush1.bf16.xpose.msra.mxu0 0
        %725 = vmatprep.subr.bf16.mxu0 0
        %726 = vmatpush1.bf16.xpose.msra.mxu0 0
        %727 = vmatprep.subr.bf16.mxu0 0
        %728 = vmatpush1.bf16.xpose.msra.mxu0 0
        %729 = vmatprep.subr.bf16.mxu0 0
        %730 = vmatpush1.bf16.xpose.msra.mxu0 0
        %731 = vmatprep.subr.bf16.mxu0 0
        %732 = vmatpush1.bf16.xpose.msra.mxu0 0
        %733 = vmatprep.subr.bf16.mxu0 0
        %734 = vmatpush1.bf16.xpose.msra.mxu0 0
        %735 = vmatprep.subr.bf16.mxu0 0
        %736 = vmatpush1.bf16.xpose.msra.mxu0 0
        %737 = vmatprep.mubr.bf16.mxu0 0
        %738 = vmatmul.mubr.bf16.gmra.mrb[0].mxu0 %v700
        %v739 = vpop.f32.mrb[0].mxu0
        %v740 = vadd.f32 %v474, %v739
        %v741 = vpop.f32.mrb[0].mxu0
        %v742 = vpop.f32.mrb[0].mxu0
        %v743 = vpop.f32.mrb[0].mxu0
        %744 = vdwg.mxu0
        %v745 = vsel %vm522, %v740, -inf
        %746 = vmax.xlane.f32.xlu0 %v745
        %v747 = vpop.xlane.xlu0 %746
        %v748 = vsub.f32 %v740, %v747
        %v749 = vmul.f32 %v748, 1.442695
        %v750 = vpow.pop %v749
        %v751 = vsel %vm522, %v750, 0.0
        %752 = vadd.xlane.f32.xlu0 %v751
        %v753 = vpop.xlane.xlu0 %752
        %v754 = vrcp.pop %v753
        %v755 = vmul.f32 %v750, %v754
        %v756 = vpack.c.bf16 %v755, %v755
        %757 = vrot.lane.b32.xlu0 %v468, 64
        %v758 = vpop.permute.xlu0 %757
        %v760 = vsel %vm522, %v756, 0
        %v763 = vsel %vm538, %v758, 0
        %765 = vmatprep.subr.bf16.mxu0 0
        %766 = vmatpush1.bf16.msra.mxu0 %v763
        %767 = vmatprep.subr.bf16.mxu0 0
        %768 = vmatpush1.bf16.msra.mxu0 0
        %769 = vmatprep.subr.bf16.mxu0 0
        %770 = vmatpush1.bf16.msra.mxu0 0
        %771 = vmatprep.subr.bf16.mxu0 0
        %772 = vmatpush1.bf16.msra.mxu0 0
        %773 = vmatprep.subr.bf16.mxu0 0
        %774 = vmatpush1.bf16.msra.mxu0 0
        %775 = vmatprep.subr.bf16.mxu0 0
        %776 = vmatpush1.bf16.msra.mxu0 0
        %777 = vmatprep.subr.bf16.mxu0 0
        %778 = vmatpush1.bf16.msra.mxu0 0
        %779 = vmatprep.subr.bf16.mxu0 0
        %780 = vmatpush1.bf16.msra.mxu0 0
        %781 = vmatprep.subr.bf16.mxu0 0
        %782 = vmatpush1.bf16.msra.mxu0 0
        %783 = vmatprep.subr.bf16.mxu0 0
        %784 = vmatpush1.bf16.msra.mxu0 0
        %785 = vmatprep.subr.bf16.mxu0 0
        %786 = vmatpush1.bf16.msra.mxu0 0
        %787 = vmatprep.subr.bf16.mxu0 0
        %788 = vmatpush1.bf16.msra.mxu0 0
        %789 = vmatprep.subr.bf16.mxu0 0
        %790 = vmatpush1.bf16.msra.mxu0 0
        %791 = vmatprep.subr.bf16.mxu0 0
        %792 = vmatpush1.bf16.msra.mxu0 0
        %793 = vmatprep.subr.bf16.mxu0 0
        %794 = vmatpush1.bf16.msra.mxu0 0
        %795 = vmatprep.subr.bf16.mxu0 0
        %796 = vmatpush1.bf16.msra.mxu0 0
        %797 = vmatprep.mubr.bf16.mxu0 0
        %798 = vmatmul.mubr.bf16.gmra.mrb[0].mxu0 %v760
        %v799 = vpop.f32.mrb[0].mxu0
        %v800 = vadd.f32 0.0, %v799
        %v801 = vpop.f32.mrb[0].mxu0
        %v802 = vpop.f32.mrb[0].mxu0
        %v803 = vpop.f32.mrb[0].mxu0
        %804 = vdwg.mxu0
        %805 = vrot.lane.b32.xlu0 %v466, 32
        %v806 = vpop.permute.xlu0 %805
        %807 = vrot.lane.b32.xlu0 %v467, 32
        %v808 = vpop.permute.xlu0 %807
        %v810 = vsel %vm475, %v806, 0
        %v813 = vsel %vm475, %v808, 0
        %815 = vmatprep.subr.bf16.mxu0 0
        %816 = vmatpush1.bf16.xpose.msra.mxu0 %v813
        %817 = vmatprep.subr.bf16.mxu0 0
        %818 = vmatpush1.bf16.xpose.msra.mxu0 0
        %819 = vmatprep.subr.bf16.mxu0 0
        %820 = vmatpush1.bf16.xpose.msra.mxu0 0
        %821 = vmatprep.subr.bf16.mxu0 0
        %822 = vmatpush1.bf16.xpose.msra.mxu0 0
        %823 = vmatprep.subr.bf16.mxu0 0
        %824 = vmatpush1.bf16.xpose.msra.mxu0 0
        %825 = vmatprep.subr.bf16.mxu0 0
        %826 = vmatpush1.bf16.xpose.msra.mxu0 0
        %827 = vmatprep.subr.bf16.mxu0 0
        %828 = vmatpush1.bf16.xpose.msra.mxu0 0
        %829 = vmatprep.subr.bf16.mxu0 0
        %830 = vmatpush1.bf16.xpose.msra.mxu0 0
        %831 = vmatprep.subr.bf16.mxu0 0
        %832 = vmatpush1.bf16.xpose.msra.mxu0 0
        %833 = vmatprep.subr.bf16.mxu0 0
        %834 = vmatpush1.bf16.xpose.msra.mxu0 0
        %835 = vmatprep.subr.bf16.mxu0 0
        %836 = vmatpush1.bf16.xpose.msra.mxu0 0
        %837 = vmatprep.subr.bf16.mxu0 0
        %838 = vmatpush1.bf16.xpose.msra.mxu0 0
        %839 = vmatprep.subr.bf16.mxu0 0
        %840 = vmatpush1.bf16.xpose.msra.mxu0 0
        %841 = vmatprep.subr.bf16.mxu0 0
        %842 = vmatpush1.bf16.xpose.msra.mxu0 0
        %843 = vmatprep.subr.bf16.mxu0 0
        %844 = vmatpush1.bf16.xpose.msra.mxu0 0
        %845 = vmatprep.subr.bf16.mxu0 0
        %846 = vmatpush1.bf16.xpose.msra.mxu0 0
        %847 = vmatprep.mubr.bf16.mxu0 0
        %848 = vmatmul.mubr.bf16.gmra.mrb[0].mxu0 %v810
        %v849 = vpop.f32.mrb[0].mxu0
        %v850 = vadd.f32 %v474, %v849
        %v851 = vpop.f32.mrb[0].mxu0
        %v852 = vpop.f32.mrb[0].mxu0
        %v853 = vpop.f32.mrb[0].mxu0
        %854 = vdwg.mxu0
        %v855 = vsel %vm522, %v850, -inf
        %856 = vmax.xlane.f32.xlu0 %v855
        %v857 = vpop.xlane.xlu0 %856
        %v858 = vsub.f32 %v850, %v857
        %v859 = vmul.f32 %v858, 1.442695
        %v860 = vpow.pop %v859
        %v861 = vsel %vm522, %v860, 0.0
        %862 = vadd.xlane.f32.xlu0 %v861
        %v863 = vpop.xlane.xlu0 %862
        %v864 = vrcp.pop %v863
        %v865 = vmul.f32 %v860, %v864
        %v866 = vpack.c.bf16 %v865, %v865
        %867 = vrot.lane.b32.xlu0 %v468, 32
        %v868 = vpop.permute.xlu0 %867
        %v870 = vsel %vm522, %v866, 0
        %v873 = vsel %vm538, %v868, 0
        %875 = vmatprep.subr.bf16.mxu0 0
        %876 = vmatpush1.bf16.msra.mxu0 %v873
        %877 = vmatprep.subr.bf16.mxu0 0
        %878 = vmatpush1.bf16.msra.mxu0 0
        %879 = vmatprep.subr.bf16.mxu0 0
        %880 = vmatpush1.bf16.msra.mxu0 0
        %881 = vmatprep.subr.bf16.mxu0 0
        %882 = vmatpush1.bf16.msra.mxu0 0
        %883 = vmatprep.subr.bf16.mxu0 0
        %884 = vmatpush1.bf16.msra.mxu0 0
        %885 = vmatprep.subr.bf16.mxu0 0
        %886 = vmatpush1.bf16.msra.mxu0 0
        %887 = vmatprep.subr.bf16.mxu0 0
        %888 = vmatpush1.bf16.msra.mxu0 0
        %889 = vmatprep.subr.bf16.mxu0 0
        %890 = vmatpush1.bf16.msra.mxu0 0
        %891 = vmatprep.subr.bf16.mxu0 0
        %892 = vmatpush1.bf16.msra.mxu0 0
        %893 = vmatprep.subr.bf16.mxu0 0
        %894 = vmatpush1.bf16.msra.mxu0 0
        %895 = vmatprep.subr.bf16.mxu0 0
        %896 = vmatpush1.bf16.msra.mxu0 0
        %897 = vmatprep.subr.bf16.mxu0 0
        %898 = vmatpush1.bf16.msra.mxu0 0
        %899 = vmatprep.subr.bf16.mxu0 0
        %900 = vmatpush1.bf16.msra.mxu0 0
        %901 = vmatprep.subr.bf16.mxu0 0
        %902 = vmatpush1.bf16.msra.mxu0 0
        %903 = vmatprep.subr.bf16.mxu0 0
        %904 = vmatpush1.bf16.msra.mxu0 0
        %905 = vmatprep.subr.bf16.mxu0 0
        %906 = vmatpush1.bf16.msra.mxu0 0
        %907 = vmatprep.mubr.bf16.mxu0 0
        %908 = vmatmul.mubr.bf16.gmra.mrb[0].mxu0 %v870
        %v909 = vpop.f32.mrb[0].mxu0
        %v910 = vadd.f32 0.0, %v909
        %v911 = vpop.f32.mrb[0].mxu0
        %v912 = vpop.f32.mrb[0].mxu0
        %v913 = vpop.f32.mrb[0].mxu0
        %914 = vdwg.mxu0
        %916 = vrot.lane.b32.xlu0 %v690, 32
        %v917 = vpop.permute.xlu0 %916
        %920 = vrot.lane.b32.xlu0 %v800, 64
        %v921 = vpop.permute.xlu0 %920
        %924 = vrot.lane.b32.xlu0 %v910, 96
        %v925 = vpop.permute.xlu0 %924
        %v927 = vsel %vm475, %v577, %v917
        %vm928 = vcmask 523264
        %v929 = vsel %vm928, %v927, %v921
        %vm930 = vcmask 785408
        %v931 = vsel %vm930, %v929, %v925
        %v932 = vpack.c.bf16 %v931, %v931
        %v933 = vld [vmem:[#allocation5] sm:$0xf]
        %v934 = vld [vmem:[#allocation5 + $0x4] sm:$0xf]
        %v935 = vld [vmem:[#allocation5 + $0x8] sm:$0xf]
        %v936 = vld [vmem:[#allocation5 + $0xc] sm:$0xf]
        %v937 = vld [vmem:[#allocation5 + $0x10] sm:$0xf]
        %v938 = vld [vmem:[#allocation5 + $0x14] sm:$0xf]
        %v939 = vld [vmem:[#allocation5 + $0x18] sm:$0xf]
        %v940 = vld [vmem:[#allocation5 + $0x1c] sm:$0xf]
        %v941 = vld [vmem:[#allocation5 + $0x20] sm:$0xf]
        %v942 = vld [vmem:[#allocation5 + $0x24] sm:$0xf]
        %v943 = vld [vmem:[#allocation5 + $0x28] sm:$0xf]
        %v944 = vld [vmem:[#allocation5 + $0x2c] sm:$0xf]
        %v945 = vld [vmem:[#allocation5 + $0x30] sm:$0xf]
        %v946 = vld [vmem:[#allocation5 + $0x34] sm:$0xf]
        %v947 = vld [vmem:[#allocation5 + $0x38] sm:$0xf]
        %v948 = vld [vmem:[#allocation5 + $0x3c] sm:$0xf]
        %v949 = vld [vmem:[%s3] sm:$0x1]
        %v951 = vlaneseq
        %v952 = vshrl.u32 %v951, 7
        %v953 = vsub.s32 0, %v952
        %v954 = vrot.slane %v949, %v953
        %v972 = vunpack.c.l.b16 %v933
        %v973 = vunpack.c.l.b16 %v934
        %v974 = vunpack.c.l.b16 %v935
        %v975 = vunpack.c.l.b16 %v936
        %v976 = vunpack.c.l.b16 %v937
        %v977 = vunpack.c.l.b16 %v938
        %v978 = vunpack.c.l.b16 %v939
        %v979 = vunpack.c.l.b16 %v940
        %v980 = vunpack.c.l.b16 %v941
        %v981 = vunpack.c.l.b16 %v942
        %v982 = vunpack.c.l.b16 %v943
        %v983 = vunpack.c.l.b16 %v944
        %v984 = vunpack.c.l.b16 %v945
        %v985 = vunpack.c.l.b16 %v946
        %v986 = vunpack.c.l.b16 %v947
        %v987 = vunpack.c.l.b16 %v948
        %v988 = vpack.c.b16 %v973, %v972
        %v989 = vpack.c.b16 %v975, %v974
        %v990 = vpack.c.b16 %v977, %v976
        %v991 = vpack.c.b16 %v979, %v978
        %v992 = vpack.c.b16 %v981, %v980
        %v993 = vpack.c.b16 %v983, %v982
        %v994 = vpack.c.b16 %v985, %v984
        %v995 = vpack.c.b16 %v987, %v986
        %1004 = vmatprep.subr.bf16.mxu0 0
        %1005 = vmatpush1.bf16.msra.mxu0 %v988
        %1006 = vmatprep.subr.bf16.mxu0 0
        %1007 = vmatpush1.bf16.msra.mxu0 %v989
        %1008 = vmatprep.subr.bf16.mxu0 0
        %1009 = vmatpush1.bf16.msra.mxu0 %v990
        %1010 = vmatprep.subr.bf16.mxu0 0
        %1011 = vmatpush1.bf16.msra.mxu0 %v991
        %1012 = vmatprep.subr.bf16.mxu0 0
        %1013 = vmatpush1.bf16.msra.mxu0 %v992
        %1014 = vmatprep.subr.bf16.mxu0 0
        %1015 = vmatpush1.bf16.msra.mxu0 %v993
        %1016 = vmatprep.subr.bf16.mxu0 0
        %1017 = vmatpush1.bf16.msra.mxu0 %v994
        %1018 = vmatprep.subr.bf16.mxu0 0
        %1019 = vmatpush1.bf16.msra.mxu0 %v995
        %1020 = vmatprep.subr.bf16.mxu0 0
        %1021 = vmatpush1.bf16.msra.mxu0 0
        %1022 = vmatprep.subr.bf16.mxu0 0
        %1023 = vmatpush1.bf16.msra.mxu0 0
        %1024 = vmatprep.subr.bf16.mxu0 0
        %1025 = vmatpush1.bf16.msra.mxu0 0
        %1026 = vmatprep.subr.bf16.mxu0 0
        %1027 = vmatpush1.bf16.msra.mxu0 0
        %1028 = vmatprep.subr.bf16.mxu0 0
        %1029 = vmatpush1.bf16.msra.mxu0 0
        %1030 = vmatprep.subr.bf16.mxu0 0
        %1031 = vmatpush1.bf16.msra.mxu0 0
        %1032 = vmatprep.subr.bf16.mxu0 0
        %1033 = vmatpush1.bf16.msra.mxu0 0
        %1034 = vmatprep.subr.bf16.mxu0 0
        %1035 = vmatpush1.bf16.msra.mxu0 0
        %1036 = vmatprep.mubr.bf16.mxu0 0
        %1037 = vmatmul.mubr.bf16.gmra.mrb[0].mxu0 %v932
        %v1038 = vpop.f32.mrb[0].mxu0
        %v1039 = vadd.f32 %v954, %v1038
        %v1040 = vpop.f32.mrb[0].mxu0
        %v1041 = vpop.f32.mrb[0].mxu0
        %v1042 = vpop.f32.mrb[0].mxu0
        %1043 = vdwg.mxu0
        %1044 = vst [vmem:[%s218] sm:$0xff] %v1039
        %s1045 = sand.u32 %s117, 1
        %s1046 = scalar_lea.sflag [#allocation4], %s1045
        %s1047 = sand.u32 %s117, 1
        %s1048 = smul.addr %s1047, 8
        %s1049 = scalar_lea.vmem [#allocation7], %s1048
        // Predicated region
        $region45: #{mha_forward.1} parent=35 // pred_check
          %p1050 = pneg %p127
        $region46: #{mha_forward.1} parent=35 // pred_check_branch
          %1052 = sbr.rel (%p1050) target = $region48
        $region47: #{mha_forward.1} parent=35 // pred_region
          %s1054 = ssub.s32 128, 128
          %1055 = vsyncadd %s1046, %s1054
          %s1056 = smul.addr %s20, 128
          %s1057 = scalar_lea.hbm %s4, %s1056
          %s1059 = sshll.u32 %s1049, 4
          %s1060 = int_to_ptr.vmem [resolvable:$true] %s1059
          %1062 = dma.vmem_to_hbm [thread:$0]  %s1060, 128, %s1057, %s1046
        $region48: #{mha_forward.1} parent=35 // pred_fallthru
          _
      $region36: #{mha_forward.1} parent=5 // pred_fallthru
        _
      %p1063 = scmp.le.s32.totalorder 2, %s15
      // Predicated region
      $region49: #{mha_forward.1} parent=5 // pred_check
        %p1064 = pneg %p1063
      $region50: #{mha_forward.1} parent=5 // pred_check_branch
        %1066 = sbr.rel (%p1064) target = $region52
      $region51: #{mha_forward.1} parent=5 // pred_region
        %s1067 = ssub.s32 %s15, 2
        // Predicated region
        $region53: #{mha_forward.1} parent=51 // pred_check
          %p1068 = pneg %p133
        $region54: #{mha_forward.1} parent=51 // pred_check_branch
          %1070 = sbr.rel (%p1068) target = $region56
        $region55: #{mha_forward.1} parent=51 // pred_region
          %s1071 = sand.u32 %s118, 1
          %s1072 = scalar_lea.sflag [#allocation4], %s1071
          %s1073 = sand.u32 %s118, 1
          %s1074 = smul.addr %s1073, 8
          %s1075 = scalar_lea.vmem [#allocation7], %s1074
          %1076 = dma.done %s1072, 128
        $region56: #{mha_forward.1} parent=51 // pred_fallthru
          _
      $region52: #{mha_forward.1} parent=5 // pred_fallthru
        _
    $region6: #{mha_forward.1} parent=1 // loop_footer
      %s19 = sadd.s32 1, %s15
    $region7: #{mha_forward.1} parent=1 // loop_footer_branch
      %14 = sbr.rel target = $region3
    $region8: #{mha_forward.1} parent=1 // loop_exit
      _
    %1077 = vsyncpa [#allocation3], 1
    %s1078 = scalar_lea.sflag [#allocation3], 1
    %1079 = vsyncpa %s1078, 1
    %1080 = vsyncpa [#allocation6], 1
    %1081 = vsyncpa [#allocation4], 1
    %s1082 = scalar_lea.sflag [#allocation4], 1
    %1083 = vsyncpa %s1082, 1

</llo_original>
